<compile_context>
chip_gen: v5e
topology: v5e:2x2
jax: 0.10.0
libtpu: 0.0.40
codegen_flags: <defaults>
</compile_context>

<pallas_src>
import functools

import jax
import jax.numpy as jnp
from jax.experimental import pallas as pl
from jax.experimental.pallas import tpu as pltpu


def _round_up(x, m):
    return (x + m - 1) // m * m


def _vmem_capacity_bytes():
    """Per-TensorCore VMEM capacity; conservative 64 MiB fallback (v7x size)."""
    try:
        cap = int(pltpu.get_tpu_info().vmem_capacity_bytes)
        if cap > 0:
            return cap
    except Exception:
        pass
    return 64 << 20


def _vmem_usage_bytes(tb, tn, n_h_pad, in_isz, out_isz):
    """Estimate of the kernel's VMEM footprint for a (tb, tn) tiling."""
    K = 3 * n_h_pad
    acts = 3 * 2 * tb * n_h_pad * in_isz      # h1/h2/h3 tiles, double-buffered
    w = 2 * K * tn * in_isz                   # stacked W^T tile, double-buffered
    bias = 2 * 8 * tn * 4                     # (1, tn) f32, sublane-padded to 8
    out = 2 * tb * tn * out_isz               # output tile, double-buffered
    acc = tb * tn * 4                         # f32 accumulator temp
    return acts + w + bias + out + acc + (2 << 20)   # + headroom


def cat3_dense_kernel(h1_ref, h2_ref, h3_ref, w_ref, b_ref, o_ref, *, n_h_pad):
    # Three MXU dots on static, 128-aligned K-slices of the stacked W^T.  Same
    # total MXU work as one big-K dot; the only extra cost is two f32 VPU adds
    # per output element, and there is no lane-concat VMEM temp.
    acc = jnp.dot(h1_ref[...], w_ref[0:n_h_pad, :],
                  preferred_element_type=jnp.float32)
    acc = acc + jnp.dot(h2_ref[...], w_ref[n_h_pad:2 * n_h_pad, :],
                        preferred_element_type=jnp.float32)
    acc = acc + jnp.dot(h3_ref[...], w_ref[2 * n_h_pad:3 * n_h_pad, :],
                        preferred_element_type=jnp.float32)
    acc = acc + b_ref[...]                    # (1, tn) f32, broadcasts over rows
    o_ref[...] = jnp.maximum(acc, 0.0).astype(o_ref.dtype)


def prepare_cat3_dense_params(weight, bias, *, param_dtype=jnp.bfloat16):
    """One-time parameter prep (transpose / pad / stack hoisted off the call path).

    weight: (n_h, 3*n_h) PyTorch nn.Linear layout;  bias: (n_h,)
    param_dtype: MXU-input dtype for the weight AND activations (fixed here so
      there is no per-call weight cast).  Default bf16 (f32 accumulate in the
      kernel); pass jnp.float32 for strict-f32 numerics.
    Returns:
      wt  : (3*n_h_pad, n_h_pad)  stacked, transposed, zero-padded W^T
      b2d : (1, n_h_pad)          zero-padded bias (f32; bias add + ReLU are f32)
      n_h : original feature size
    """
    n_h, three_nh = weight.shape
    assert three_nh == 3 * n_h
    n_h_pad = _round_up(n_h, 128)

    wt = jnp.zeros((3 * n_h_pad, n_h_pad), dtype=param_dtype)
    for k in range(3):
        blk = weight[:, k * n_h:(k + 1) * n_h].T.astype(param_dtype)   # (n_h, n_h)
        wt = wt.at[k * n_h_pad:k * n_h_pad + n_h, :n_h].set(blk)

    b2d = jnp.zeros((1, n_h_pad), dtype=jnp.float32).at[0, :n_h].set(
        bias.astype(jnp.float32))
    return wt, b2d, n_h


def cat3_dense(h1, h2, h3, wt, b2d, n_h, *, batch_tile=256):
    """h1,h2,h3: [B, n_h];  wt/b2d/n_h from prepare_cat3_dense_params."""
    B, nh_in = h1.shape
    assert nh_in == n_h and h2.shape == h1.shape and h3.shape == h1.shape
    n_h_pad = b2d.shape[1]
    K = wt.shape[0]
    assert K == 3 * n_h_pad

    cdt = wt.dtype                                   # compute dtype fixed at prep
    in_isz = jnp.dtype(cdt).itemsize
    out_dtype = h1.dtype
    out_isz = jnp.dtype(out_dtype).itemsize
    sub = 8 * (4 // in_isz)                          # sublane pack: f32->8, bf16->16, 8-bit->32

    cap = _vmem_capacity_bytes()
    budget = int(cap * 0.80)                         # ~51 MiB on v7x, ~102 MiB on v5e/v6e

    # ---- tile search: prefer full-N (weight resident, DMA'd once); shrink tn,
    # then tb, until the footprint fits the per-chip budget.
    tb = max(sub, (min(batch_tile, _round_up(B, sub)) // sub) * sub)
    tn_cands = [d * 128 for d in range(n_h_pad // 128, 0, -1)
                if n_h_pad % (d * 128) == 0]
    tn = tn_cands[-1]
    found = False
    while not found:
        for cand in tn_cands:
            if _vmem_usage_bytes(tb, cand, n_h_pad, in_isz, out_isz) <= budget:
                tn, found = cand, True
                break
        if not found:
            if tb <= sub:
                tn, found = tn_cands[-1], True       # smallest tiles; give up shrinking
            else:
                tb = max(sub, (tb // 2 // sub) * sub)

    # v7x megacore: if a single batch tile would cover the whole batch, split it
    # so the parallel batch axis can spread across the two TensorCores.
    if _round_up(B, tb) == tb and tb >= 2 * sub and (tb // 2) % sub == 0:
        tb //= 2

    B_pad = _round_up(B, tb)

    # ---- wrapper-side pad/cast only when actually needed (each is a full extra
    # HBM pass over the activations on this memory-bound op).
    need_pad = (n_h_pad != n_h) or (B_pad != B)

    def prep(h):
        if h.dtype != cdt:
            h = h.astype(cdt)
        if need_pad:
            h = jnp.pad(h, ((0, B_pad - B), (0, n_h_pad - n_h)))
        return h

    h1p, h2p, h3p = prep(h1), prep(h2), prep(h3)

    if tn == n_h_pad:
        # Weight fully resident: 1-D batch grid, constant weight block index ->
        # Pallas fetches the stacked W^T from HBM exactly once.
        grid = (B_pad // tb,)
        in_specs = [
            pl.BlockSpec((tb, n_h_pad), lambda i: (i, 0)),      # h1
            pl.BlockSpec((tb, n_h_pad), lambda i: (i, 0)),      # h2
            pl.BlockSpec((tb, n_h_pad), lambda i: (i, 0)),      # h3
            pl.BlockSpec((K, n_h_pad), lambda i: (0, 0)),       # stacked W^T (resident)
            pl.BlockSpec((1, n_h_pad), lambda i: (0, 0)),       # bias
        ]
        out_spec = pl.BlockSpec((tb, n_h_pad), lambda i: (i, 0))
        dims = ("parallel",)
    else:
        # Weight tiled along N: batch outer, N inner (activation tile index is
        # constant across the inner axis so it is not re-fetched).
        grid = (B_pad // tb, n_h_pad // tn)
        in_specs = [
            pl.BlockSpec((tb, n_h_pad), lambda i, j: (i, 0)),   # h1
            pl.BlockSpec((tb, n_h_pad), lambda i, j: (i, 0)),   # h2
            pl.BlockSpec((tb, n_h_pad), lambda i, j: (i, 0)),   # h3
            pl.BlockSpec((K, tn),       lambda i, j: (0, j)),   # stacked W^T
            pl.BlockSpec((1, tn),       lambda i, j: (0, j)),   # bias
        ]
        out_spec = pl.BlockSpec((tb, tn), lambda i, j: (i, j))
        dims = ("parallel", "parallel")

    kernel = functools.partial(cat3_dense_kernel, n_h_pad=n_h_pad)

    out = pl.pallas_call(
        kernel,
        out_shape=jax.ShapeDtypeStruct((B_pad, n_h_pad), out_dtype),
        grid=grid,
        in_specs=in_specs,
        out_specs=out_spec,
        compiler_params=pltpu.CompilerParams(
            dimension_semantics=dims,
            vmem_limit_bytes=int(max(32 << 20, budget)),
        ),
    )(h1p, h2p, h3p, wt, b2d)

    if need_pad:
        out = out[:B, :n_h]
    return out


def cat3_dense_reference(h1, h2, h3, weight, bias):
    x = jnp.concatenate([h1, h2, h3], axis=1)
    return jnp.maximum(x @ weight.T + bias, 0.0)


if __name__ == "__main__":
    key = jax.random.PRNGKey(0)
    B, n_h = 8, 32
    # NOTE: at this tiny shape the kernel is pure launch/DMA overhead; the
    # tiled design pays off at B and n_h in the hundreds+.

    k1, k2, k3, kw, kb = jax.random.split(key, 5)
    h1 = jax.random.normal(k1, (B, n_h), dtype=jnp.float32)
    h2 = jax.random.normal(k2, (B, n_h), dtype=jnp.float32)
    h3 = jax.random.normal(k3, (B, n_h), dtype=jnp.float32)

    bound = 1.0 / jnp.sqrt(3.0 * n_h)
    weight = jax.random.uniform(kw, (n_h, 3 * n_h), minval=-bound, maxval=bound,
                                dtype=jnp.float32)
    bias = jax.random.uniform(kb, (n_h,), minval=-bound, maxval=bound,
                              dtype=jnp.float32)

    # Strict f32 MXU inputs here so the 1e-5 check holds; production default is
    # param_dtype=jnp.bfloat16 (f32 accumulate, f32 bias+ReLU inside the kernel).
    wt, b2d, n_h_p = prepare_cat3_dense_params(weight, bias,
                                               param_dtype=jnp.float32)

    out = cat3_dense(h1, h2, h3, wt, b2d, n_h_p)
    out = jax.block_until_ready(out)

    ref = cat3_dense_reference(h1, h2, h3, weight, bias)
    assert out.shape == (B, n_h)
    assert jnp.allclose(out, ref, atol=1e-5, rtol=1e-5)

    print("KERNEL_OK")
</pallas_src>

<mosaic_0001>
module attributes {stable_mosaic.version = 11 : i64} {
  func.func @cat3_dense_kernel(%arg0: i32, %arg1: memref<8x128xf32, #tpu.memory_space<vmem>>, %arg2: memref<8x128xf32, #tpu.memory_space<vmem>>, %arg3: memref<8x128xf32, #tpu.memory_space<vmem>>, %arg4: memref<384x128xf32, #tpu.memory_space<vmem>>, %arg5: memref<1x128xf32, #tpu.memory_space<vmem>>, %arg6: memref<8x128xf32, #tpu.memory_space<vmem>>) attributes {dimension_semantics = [#tpu.dimension_semantics<parallel>], iteration_bounds = array<i64: 1>, scalar_prefetch = 0 : i64, scratch_operands = 0 : i64, tpu.core_type = #tpu.core_type<tc>, window_params = [{transform_indices = @transform_0, window_bounds = array<i64: 8, 128>}, {transform_indices = @transform_1, window_bounds = array<i64: 8, 128>}, {transform_indices = @transform_2, window_bounds = array<i64: 8, 128>}, {pipeline_mode = #tpu.pipeline_mode<synchronous>, transform_indices = @transform_3, window_bounds = array<i64: 384, 128>}, {pipeline_mode = #tpu.pipeline_mode<synchronous>, transform_indices = @transform_4, window_bounds = array<i64: 1, 128>}, {transform_indices = @transform_5, window_bounds = array<i64: 8, 128>}]} {
    %c0 = arith.constant 0 : index
    %c0_0 = arith.constant 0 : index
    %0 = vector.load %arg1[%c0, %c0_0] : memref<8x128xf32, #tpu.memory_space<vmem>>, vector<8x128xf32>
    %c0_1 = arith.constant 0 : index
    %c0_2 = arith.constant 0 : index
    %1 = vector.load %arg4[%c0_1, %c0_2] : memref<384x128xf32, #tpu.memory_space<vmem>>, vector<128x128xf32>
    %cst = arith.constant dense<0.000000e+00> : vector<8x128xf32>
    %2 = tpu.matmul %0, %1, %cst {dimension_numbers = #tpu.dot_dimension_numbers<[1], [0], [0], [1], [0, 0, 1, 1], [], []>} : vector<8x128xf32>, vector<128x128xf32>, vector<8x128xf32> -> vector<8x128xf32>
    %c0_3 = arith.constant 0 : index
    %c0_4 = arith.constant 0 : index
    %3 = vector.load %arg2[%c0_3, %c0_4] : memref<8x128xf32, #tpu.memory_space<vmem>>, vector<8x128xf32>
    %c128 = arith.constant 128 : index
    %c0_5 = arith.constant 0 : index
    %4 = vector.load %arg4[%c128, %c0_5] : memref<384x128xf32, #tpu.memory_space<vmem>>, vector<128x128xf32>
    %cst_6 = arith.constant dense<0.000000e+00> : vector<8x128xf32>
    %5 = tpu.matmul %3, %4, %cst_6 {dimension_numbers = #tpu.dot_dimension_numbers<[1], [0], [0], [1], [0, 0, 1, 1], [], []>} : vector<8x128xf32>, vector<128x128xf32>, vector<8x128xf32> -> vector<8x128xf32>
    %6 = arith.addf %2, %5 : vector<8x128xf32>
    %c0_7 = arith.constant 0 : index
    %c0_8 = arith.constant 0 : index
    %7 = vector.load %arg3[%c0_7, %c0_8] : memref<8x128xf32, #tpu.memory_space<vmem>>, vector<8x128xf32>
    %c256 = arith.constant 256 : index
    %c0_9 = arith.constant 0 : index
    %8 = vector.load %arg4[%c256, %c0_9] : memref<384x128xf32, #tpu.memory_space<vmem>>, vector<128x128xf32>
    %cst_10 = arith.constant dense<0.000000e+00> : vector<8x128xf32>
    %9 = tpu.matmul %7, %8, %cst_10 {dimension_numbers = #tpu.dot_dimension_numbers<[1], [0], [0], [1], [0, 0, 1, 1], [], []>} : vector<8x128xf32>, vector<128x128xf32>, vector<8x128xf32> -> vector<8x128xf32>
    %10 = arith.addf %6, %9 : vector<8x128xf32>
    %c0_11 = arith.constant 0 : index
    %c0_12 = arith.constant 0 : index
    %11 = vector.load %arg5[%c0_11, %c0_12] : memref<1x128xf32, #tpu.memory_space<vmem>>, vector<1x128xf32>
    %12 = vector.broadcast %11 : vector<1x128xf32> to vector<8x128xf32>
    %13 = arith.addf %10, %12 : vector<8x128xf32>
    %cst_13 = arith.constant 0.000000e+00 : f32
    %14 = vector.broadcast %cst_13 : f32 to vector<8x128xf32>
    %15 = arith.maximumf %13, %14 : vector<8x128xf32>
    %c0_14 = arith.constant 0 : index
    %c0_15 = arith.constant 0 : index
    %16 = vector.load %arg6[%c0_14, %c0_15] : memref<8x128xf32, #tpu.memory_space<vmem>>, vector<8x128xf32>
    tpu.vector_store %arg6[%c0_14, %c0_15], %15 {strides = array<i32>} : memref<8x128xf32, #tpu.memory_space<vmem>>, vector<8x128xf32>,
    return
  }
  func.func @transform_0(%arg0: i32) -> (i32, i32) {
    %c0_i32 = arith.constant 0 : i32
    %c0_i32_0 = arith.constant 0 : i32
    return %arg0, %c0_i32 : i32, i32
  }
  func.func @transform_1(%arg0: i32) -> (i32, i32) {
    %c0_i32 = arith.constant 0 : i32
    %c0_i32_0 = arith.constant 0 : i32
    return %arg0, %c0_i32 : i32, i32
  }
  func.func @transform_2(%arg0: i32) -> (i32, i32) {
    %c0_i32 = arith.constant 0 : i32
    %c0_i32_0 = arith.constant 0 : i32
    return %arg0, %c0_i32 : i32, i32
  }
  func.func @transform_3(%arg0: i32) -> (i32, i32) {
    %c0_i32 = arith.constant 0 : i32
    %c0_i32_0 = arith.constant 0 : i32
    %c0_i32_1 = arith.constant 0 : i32
    return %c0_i32, %c0_i32_0 : i32, i32
  }
  func.func @transform_4(%arg0: i32) -> (i32, i32) {
    %c0_i32 = arith.constant 0 : i32
    %c0_i32_0 = arith.constant 0 : i32
    %c0_i32_1 = arith.constant 0 : i32
    return %c0_i32, %c0_i32_0 : i32, i32
  }
  func.func @transform_5(%arg0: i32) -> (i32, i32) {
    %c0_i32 = arith.constant 0 : i32
    %c0_i32_0 = arith.constant 0 : i32
    return %arg0, %c0_i32 : i32, i32
  }
}

</mosaic_0001>

<llo_original>
// kernel: tpu_custom_call.1
$region0: #{tpu_custom_call.1}
  #allocation0 [shape = 'u32[]', space=smem, size = 0x4, offset = 0x4, fixed_abs, tag = 'smem constant byte address 0x4 - core index']
  #allocation1 [shape = 'u32[72,128]{1,0:T(1,128)}', space=vmem, size = 0x9000, scoped, tag = 'internal scratch']
  %s0 = inlined_call_operand.hbm [shape: f32[8,128], index: 0, kind: input, shape index: {}]
  %s1 = inlined_call_operand.hbm [shape: f32[8,128], index: 1, kind: input, shape index: {}]
  %s2 = inlined_call_operand.hbm [shape: f32[8,128], index: 2, kind: input, shape index: {}]
  %s3 = inlined_call_operand.hbm [shape: f32[384,128], index: 3, kind: input, shape index: {}]
  %s4 = inlined_call_operand.vmem [shape: f32[1,128], index: 4, kind: input, shape index: {}]
  %s5 = inlined_call_operand.hbm [shape: f32[8,128], index: 5, kind: output, shape index: {}]
  %s6 = sld [smem:[#allocation0]]
  $region46: #{tpu_custom_call.1} parent=0
    _
  %s8 = ssub.s32 1, %s6
  %s9 = scalar_select 0, %s8, %s6
  $region1: #{tpu_custom_call.1} parent=0
    #allocation2 [shape = 'u8[4096]{0}', space=vmem, size = 0x1000, scoped, tag = 'input window, operand 0, single buffered']
    #allocation3 [shape = 's32[1]{0}', space=sflag, size = 0x4, scoped, tag = 'scoped memory for tpu_custom_call.1']
    #allocation4 [shape = 's32[1]{0}', space=sflag, size = 0x4, scoped, tag = 'scoped memory for tpu_custom_call.1']
    #allocation5 [shape = 'u8[4096]{0}', space=vmem, size = 0x1000, scoped, tag = 'input window, operand 1, single buffered']
    #allocation6 [shape = 's32[1]{0}', space=sflag, size = 0x4, scoped, tag = 'scoped memory for tpu_custom_call.1']
    #allocation7 [shape = 'u8[4096]{0}', space=vmem, size = 0x1000, scoped, tag = 'input window, operand 2, single buffered']
    #allocation8 [shape = 'u8[196608]{0}', space=vmem, size = 0x30000, scoped, tag = 'input window, operand 3, single buffered']
    #allocation9 [shape = 's32[1]{0}', space=sflag, size = 0x4, scoped, tag = 'scoped memory for tpu_custom_call.1']
    #allocation10 [shape = 'u8[4096]{0}', space=vmem, size = 0x1000, scoped, tag = 'output window, operand 0, single buffered']
    %10 = vsyncpa [#allocation3], 0
    %11 = vsyncpa [#allocation6], 0
    %12 = vsyncpa [#allocation9], 0
    %13 = vsyncpa [#allocation4], 0
    // Predicated region
    $region2: #{tpu_custom_call.1} parent=1 // pred_check
      _
    $region3: #{tpu_custom_call.1} parent=1 // pred_check_branch
      %15 = sbr.rel (0) target = $region5
    $region4: #{tpu_custom_call.1} parent=1 // pred_region
      %17 = vsyncadd [#allocation3], 0
      %s19 = sshll.u32 %s0, 4
      %s20 = int_to_ptr.hbm [resolvable:$true] %s19
      %s21 = sshll.u32 [#allocation2], 4
      %s22 = int_to_ptr.vmem [resolvable:$true] %s21
      %24 = dma.hbm_to_vmem [thread:$0]  %s20, 128, %s22, [#allocation3]
    $region5: #{tpu_custom_call.1} parent=1 // pred_fallthru
      _
    // Predicated region
    $region6: #{tpu_custom_call.1} parent=1 // pred_check
      _
    $region7: #{tpu_custom_call.1} parent=1 // pred_check_branch
      %26 = sbr.rel (0) target = $region9
    $region8: #{tpu_custom_call.1} parent=1 // pred_region
      %28 = vsyncadd [#allocation6], 0
      %s30 = sshll.u32 %s1, 4
      %s31 = int_to_ptr.hbm [resolvable:$true] %s30
      %s32 = sshll.u32 [#allocation5], 4
      %s33 = int_to_ptr.vmem [resolvable:$true] %s32
      %35 = dma.hbm_to_vmem [thread:$0]  %s31, 128, %s33, [#allocation6]
    $region9: #{tpu_custom_call.1} parent=1 // pred_fallthru
      _
    // Predicated region
    $region10: #{tpu_custom_call.1} parent=1 // pred_check
      _
    $region11: #{tpu_custom_call.1} parent=1 // pred_check_branch
      %37 = sbr.rel (0) target = $region13
    $region12: #{tpu_custom_call.1} parent=1 // pred_region
      %39 = vsyncadd [#allocation6], 0
      %s41 = sshll.u32 %s2, 4
      %s42 = int_to_ptr.hbm [resolvable:$true] %s41
      %s43 = sshll.u32 [#allocation7], 4
      %s44 = int_to_ptr.vmem [resolvable:$true] %s43
      %46 = dma.hbm_to_vmem [thread:$0]  %s42, 128, %s44, [#allocation6]
    $region13: #{tpu_custom_call.1} parent=1 // pred_fallthru
      _
    // Predicated region
    $region14: #{tpu_custom_call.1} parent=1 // pred_check
      _
    $region15: #{tpu_custom_call.1} parent=1 // pred_check_branch
      %48 = sbr.rel (0) target = $region17
    $region16: #{tpu_custom_call.1} parent=1 // pred_region
      %50 = vsyncadd [#allocation9], 0
      %s51 = sshll.u32 %s3, 4
      %s52 = int_to_ptr.hbm [resolvable:$true] %s51
      %s53 = sshll.u32 [#allocation8], 4
      %s54 = int_to_ptr.vmem [resolvable:$true] %s53
      %59 = dma.hbm_to_vmem [thread:$0]  %s52, 6144, %s54, [#allocation9], 128, 128, 8
    $region17: #{tpu_custom_call.1} parent=1 // pred_fallthru
      _
    // Predicated region
    $region18: #{tpu_custom_call.1} parent=1 // pred_check
      _
    $region19: #{tpu_custom_call.1} parent=1 // pred_check_branch
      %61 = sbr.rel (0) target = $region21
    $region20: #{tpu_custom_call.1} parent=1 // pred_region
      _
    $region21: #{tpu_custom_call.1} parent=1 // pred_fallthru
      _
    // Predicated region
    $region22: #{tpu_custom_call.1} parent=1 // pred_check
      _
    $region23: #{tpu_custom_call.1} parent=1 // pred_check_branch
      %63 = sbr.rel (0) target = $region25
    $region24: #{tpu_custom_call.1} parent=1 // pred_region
      %65 = dma.done [#allocation3], 128
    $region25: #{tpu_custom_call.1} parent=1 // pred_fallthru
      _
    // Predicated region
    $region26: #{tpu_custom_call.1} parent=1 // pred_check
      _
    $region27: #{tpu_custom_call.1} parent=1 // pred_check_branch
      %67 = sbr.rel (0) target = $region29
    $region28: #{tpu_custom_call.1} parent=1 // pred_region
      %69 = dma.done [#allocation6], 128
    $region29: #{tpu_custom_call.1} parent=1 // pred_fallthru
      _
    // Predicated region
    $region30: #{tpu_custom_call.1} parent=1 // pred_check
      _
    $region31: #{tpu_custom_call.1} parent=1 // pred_check_branch
      %71 = sbr.rel (0) target = $region33
    $region32: #{tpu_custom_call.1} parent=1 // pred_region
      %73 = dma.done [#allocation6], 128
    $region33: #{tpu_custom_call.1} parent=1 // pred_fallthru
      _
    // Predicated region
    $region34: #{tpu_custom_call.1} parent=1 // pred_check
      _
    $region35: #{tpu_custom_call.1} parent=1 // pred_check_branch
      %75 = sbr.rel (0) target = $region37
    $region36: #{tpu_custom_call.1} parent=1 // pred_region
      %77 = dma.done [#allocation9], 6144
    $region37: #{tpu_custom_call.1} parent=1 // pred_fallthru
      _
    %v78 = vld [vmem:[#allocation2] sm:$0xff]
    %v79 = vld [vmem:[#allocation8] sm:$0xff]
    %v80 = vld [vmem:[#allocation8 + $0x8] sm:$0xff]
    %v81 = vld [vmem:[#allocation8 + $0x10] sm:$0xff]
    %v82 = vld [vmem:[#allocation8 + $0x18] sm:$0xff]
    %v83 = vld [vmem:[#allocation8 + $0x20] sm:$0xff]
    %v84 = vld [vmem:[#allocation8 + $0x28] sm:$0xff]
    %v85 = vld [vmem:[#allocation8 + $0x30] sm:$0xff]
    %v86 = vld [vmem:[#allocation8 + $0x38] sm:$0xff]
    %v87 = vld [vmem:[#allocation8 + $0x40] sm:$0xff]
    %v88 = vld [vmem:[#allocation8 + $0x48] sm:$0xff]
    %v89 = vld [vmem:[#allocation8 + $0x50] sm:$0xff]
    %v90 = vld [vmem:[#allocation8 + $0x58] sm:$0xff]
    %v91 = vld [vmem:[#allocation8 + $0x60] sm:$0xff]
    %v92 = vld [vmem:[#allocation8 + $0x68] sm:$0xff]
    %v93 = vld [vmem:[#allocation8 + $0x70] sm:$0xff]
    %v94 = vld [vmem:[#allocation8 + $0x78] sm:$0xff]
    %v95 = vld [vmem:[#allocation5] sm:$0xff]
    %v96 = vld [vmem:[#allocation8 + $0x80] sm:$0xff]
    %v97 = vld [vmem:[#allocation8 + $0x88] sm:$0xff]
    %v98 = vld [vmem:[#allocation8 + $0x90] sm:$0xff]
    %v99 = vld [vmem:[#allocation8 + $0x98] sm:$0xff]
    %v100 = vld [vmem:[#allocation8 + $0xa0] sm:$0xff]
    %v101 = vld [vmem:[#allocation8 + $0xa8] sm:$0xff]
    %v102 = vld [vmem:[#allocation8 + $0xb0] sm:$0xff]
    %v103 = vld [vmem:[#allocation8 + $0xb8] sm:$0xff]
    %v104 = vld [vmem:[#allocation8 + $0xc0] sm:$0xff]
    %v105 = vld [vmem:[#allocation8 + $0xc8] sm:$0xff]
    %v106 = vld [vmem:[#allocation8 + $0xd0] sm:$0xff]
    %v107 = vld [vmem:[#allocation8 + $0xd8] sm:$0xff]
    %v108 = vld [vmem:[#allocation8 + $0xe0] sm:$0xff]
    %v109 = vld [vmem:[#allocation8 + $0xe8] sm:$0xff]
    %v110 = vld [vmem:[#allocation8 + $0xf0] sm:$0xff]
    %v111 = vld [vmem:[#allocation8 + $0xf8] sm:$0xff]
    %112 = vmatpush.msra.mxu0 %v111
    %113 = vmatpush.msra.mxu0 %v110
    %114 = vmatpush.msra.mxu0 %v109
    %115 = vmatpush.msra.mxu0 %v108
    %116 = vmatpush.msra.mxu0 %v107
    %117 = vmatpush.msra.mxu0 %v106
    %118 = vmatpush.msra.mxu0 %v105
    %119 = vmatpush.msra.mxu0 %v104
    %120 = vmatpush.msra.mxu0 %v103
    %121 = vmatpush.msra.mxu0 %v102
    %122 = vmatpush.msra.mxu0 %v101
    %123 = vmatpush.msra.mxu0 %v100
    %124 = vmatpush.msra.mxu0 %v99
    %125 = vmatpush.msra.mxu0 %v98
    %126 = vmatpush.msra.mxu0 %v97
    %127 = vmatpush.msra.mxu0 %v96
    %128 = vmatmul.f32.gmra.mxu0 %v95
    %v129 = vpop.f32.mrf.mxu0
    %v130 = vadd.f32 0.0, %v129
    %131 = vdwg.mxu0
    %132 = vmatpush.msra.mxu0 %v94
    %133 = vmatpush.msra.mxu0 %v93
    %134 = vmatpush.msra.mxu0 %v92
    %135 = vmatpush.msra.mxu0 %v91
    %136 = vmatpush.msra.mxu0 %v90
    %137 = vmatpush.msra.mxu0 %v89
    %138 = vmatpush.msra.mxu0 %v88
    %139 = vmatpush.msra.mxu0 %v87
    %140 = vmatpush.msra.mxu0 %v86
    %141 = vmatpush.msra.mxu0 %v85
    %142 = vmatpush.msra.mxu0 %v84
    %143 = vmatpush.msra.mxu0 %v83
    %144 = vmatpush.msra.mxu0 %v82
    %145 = vmatpush.msra.mxu0 %v81
    %146 = vmatpush.msra.mxu0 %v80
    %147 = vmatpush.msra.mxu0 %v79
    %148 = vmatmul.f32.gmra.mxu0 %v78
    %v149 = vpop.f32.mrf.mxu0
    %v150 = vadd.f32 %v130, %v149
    %151 = vdwg.mxu0
    %v152 = vld [vmem:[#allocation7] sm:$0xff]
    %v153 = vld [vmem:[#allocation8 + $0x100] sm:$0xff]
    %v154 = vld [vmem:[#allocation8 + $0x108] sm:$0xff]
    %v155 = vld [vmem:[#allocation8 + $0x110] sm:$0xff]
    %v156 = vld [vmem:[#allocation8 + $0x118] sm:$0xff]
    %v157 = vld [vmem:[#allocation8 + $0x120] sm:$0xff]
    %v158 = vld [vmem:[#allocation8 + $0x128] sm:$0xff]
    %v159 = vld [vmem:[#allocation8 + $0x130] sm:$0xff]
    %v160 = vld [vmem:[#allocation8 + $0x138] sm:$0xff]
    %v161 = vld [vmem:[#allocation8 + $0x140] sm:$0xff]
    %v162 = vld [vmem:[#allocation8 + $0x148] sm:$0xff]
    %v163 = vld [vmem:[#allocation8 + $0x150] sm:$0xff]
    %v164 = vld [vmem:[#allocation8 + $0x158] sm:$0xff]
    %v165 = vld [vmem:[#allocation8 + $0x160] sm:$0xff]
    %v166 = vld [vmem:[#allocation8 + $0x168] sm:$0xff]
    %v167 = vld [vmem:[#allocation8 + $0x170] sm:$0xff]
    %v168 = vld [vmem:[#allocation8 + $0x178] sm:$0xff]
    %169 = vmatpush.msra.mxu0 %v168
    %170 = vmatpush.msra.mxu0 %v167
    %171 = vmatpush.msra.mxu0 %v166
    %172 = vmatpush.msra.mxu0 %v165
    %173 = vmatpush.msra.mxu0 %v164
    %174 = vmatpush.msra.mxu0 %v163
    %175 = vmatpush.msra.mxu0 %v162
    %176 = vmatpush.msra.mxu0 %v161
    %177 = vmatpush.msra.mxu0 %v160
    %178 = vmatpush.msra.mxu0 %v159
    %179 = vmatpush.msra.mxu0 %v158
    %180 = vmatpush.msra.mxu0 %v157
    %181 = vmatpush.msra.mxu0 %v156
    %182 = vmatpush.msra.mxu0 %v155
    %183 = vmatpush.msra.mxu0 %v154
    %184 = vmatpush.msra.mxu0 %v153
    %185 = vmatmul.f32.gmra.mxu0 %v152
    %v186 = vpop.f32.mrf.mxu0
    %v187 = vadd.f32 0.0, %v186
    %188 = vdwg.mxu0
    %v189 = vadd.f32 %v150, %v187
    %v190 = vld [vmem:[%s4] sm:$0x1]
    %v192 = vperm.slane %v190, 0
    %v194 = vadd.f32 %v189, %v192
    %v195 = vmax.f32 %v194, 0.0
    %196 = vst [vmem:[#allocation10] sm:$0xff] %v195
    // Predicated region
    $region38: #{tpu_custom_call.1} parent=1 // pred_check
      _
    $region39: #{tpu_custom_call.1} parent=1 // pred_check_branch
      %198 = sbr.rel (0) target = $region41
    $region40: #{tpu_custom_call.1} parent=1 // pred_region
      %200 = vsyncadd [#allocation4], 0
      %s202 = sshll.u32 [#allocation10], 4
      %s203 = int_to_ptr.vmem [resolvable:$true] %s202
      %s204 = sshll.u32 %s5, 4
      %s205 = int_to_ptr.hbm [resolvable:$true] %s204
      %207 = dma.vmem_to_hbm [thread:$0]  %s203, 128, %s205, [#allocation4]
    $region41: #{tpu_custom_call.1} parent=1 // pred_fallthru
      _
    // Predicated region
    $region42: #{tpu_custom_call.1} parent=1 // pred_check
      _
    $region43: #{tpu_custom_call.1} parent=1 // pred_check_branch
      %209 = sbr.rel (0) target = $region45
    $region44: #{tpu_custom_call.1} parent=1 // pred_region
      %211 = dma.done [#allocation4], 128
    $region45: #{tpu_custom_call.1} parent=1 // pred_fallthru
      _
    %212 = vsyncpa [#allocation3], 1
    %213 = vsyncpa [#allocation6], 1
    %214 = vsyncpa [#allocation9], 1
    %215 = vsyncpa [#allocation4], 1

</llo_original>
